<compile_context>
chip_gen: v7x
topology: tpu7x:2x2x1
jax: 0.10.0
libtpu: 0.0.40
codegen_flags: <defaults>
</compile_context>

<pallas_src>
import numpy as np

import jax
import jax.numpy as jnp
from jax.experimental import pallas as pl
from jax.experimental.pallas import tpu as pltpu


def _round_up(x, m):
    return (x + m - 1) // m * m


def _device_kind():
    try:
        return jax.devices()[0].device_kind.lower()
    except Exception:
        return ""


def _chip_defaults():
    """Roofline-derived default tiles / VMEM caps per TPU generation."""
    kind = _device_kind()
    if "v7" in kind or "7x" in kind:
        # 64 MiB VMEM, ~3.2 TB/s, 996 TF/s: breakeven tm~310 -> spend VMEM on tm,
        # keep ti small so double-buffered weights fit.
        return dict(tm=512, ti=256, vmem_cap=56 * 1024 * 1024, cores_per_chip=2)
    if "v6" in kind:
        # 128 MiB VMEM, ~1.4 TB/s, 918 TF/s: breakeven tm~640 -> tm=1024.
        return dict(tm=1024, ti=512, vmem_cap=100 * 1024 * 1024, cores_per_chip=1)
    if "v5" in kind:
        # v5e: 128 MiB VMEM, ~0.82 TB/s, 197 TF/s: breakeven tm~250 -> tm=512.
        return dict(tm=512, ti=512, vmem_cap=100 * 1024 * 1024, cores_per_chip=1)
    # Unknown chip: conservative (fits a 64 MiB-VMEM part).
    return dict(tm=512, ti=256, vmem_cap=56 * 1024 * 1024, cores_per_chip=1)


def _llama_mlp_kernel(x_ref, wg_ref, wu_ref, wd_ref, o_ref, acc_ref):
    """One (core-split, row-tile, I-tile) step of the fused SwiGLU MLP.

    x_ref   : (tm, H)   activation rows (resident across the I loop)
    wg_ref  : (H, ti)   gate_proj^T tile
    wu_ref  : (H, ti)   up_proj^T tile
    wd_ref  : (ti, H)   down_proj^T tile
    o_ref   : (tm, H)   (partial) output rows, written on the last I step
    acc_ref : (tm, H)   f32 down-proj accumulator (VMEM scratch)
    """
    j = pl.program_id(2)

    @pl.when(j == 0)
    def _init():
        acc_ref[...] = jnp.zeros_like(acc_ref)

    x = x_ref[...]
    # Two MXU matmuls with f32 accumulation (bf16 operands on the default path).
    g = jnp.dot(x, wg_ref[...], preferred_element_type=jnp.float32)
    u = jnp.dot(x, wu_ref[...], preferred_element_type=jnp.float32)
    # SiLU(g) * u in f32: EUP sigmoid + VPU multiplies.
    h = (g * jax.nn.sigmoid(g)) * u
    # Down projection for this I tile, accumulated in f32.
    acc_ref[...] += jnp.dot(h.astype(wd_ref.dtype), wd_ref[...],
                            preferred_element_type=jnp.float32)

    @pl.when(j == pl.num_programs(2) - 1)
    def _final():
        o_ref[...] = acc_ref[...].astype(o_ref.dtype)


def prepare_llama_mlp_weights(w_gate, w_up, w_down, *, ti=None, compute_dtype=None):
    """One-time repack of PyTorch nn.Linear weights (out_features, in_features).

    Transposes to (in, out), casts to the compute dtype (bf16 by default for
    f32 weights) and zero-pads hidden -> multiple of 128 and intermediate ->
    multiple of ti.  Do this at weight-load time, NOT per forward call.
    Returns (wg_t, wu_t, wd_t, ti).
    """
    intermediate, hidden = w_gate.shape
    if compute_dtype is None:
        compute_dtype = jnp.bfloat16 if w_gate.dtype == jnp.float32 else w_gate.dtype
    if ti is None:
        ti = _chip_defaults()["ti"]

    H = _round_up(hidden, 128)
    I128 = _round_up(intermediate, 128)
    ti = _round_up(max(128, min(ti, I128)), 128)
    # Pad intermediate only up to the ti grid; padded columns/rows are zero so
    # silu(0) * 0 = 0 and the down-proj contribution of the padding is exactly 0.
    I_pad = _round_up(I128, ti)

    wg_t = jnp.pad(w_gate.T.astype(compute_dtype),
                   ((0, H - hidden), (0, I_pad - intermediate)))
    wu_t = jnp.pad(w_up.T.astype(compute_dtype),
                   ((0, H - hidden), (0, I_pad - intermediate)))
    wd_t = jnp.pad(w_down.T.astype(compute_dtype),
                   ((0, I_pad - intermediate), (0, H - hidden)))
    return wg_t, wu_t, wd_t, ti


def llama_mlp_prepared(x, wg_t, wu_t, wd_t, *, ti, tm=None, out_dtype=None,
                       num_core_splits=None, vmem_limit_bytes=None,
                       weight_buffer_count=2):
    """Hot path: x (..., hidden) against weights already repacked by
    prepare_llama_mlp_weights()."""
    orig_shape = x.shape
    hidden = int(orig_shape[-1])
    if out_dtype is None:
        out_dtype = x.dtype
    compute_dtype = wg_t.dtype
    defaults = _chip_defaults()

    H, I_pad = wg_t.shape
    assert H % 128 == 0 and hidden <= H
    assert I_pad % ti == 0
    assert wu_t.shape == (H, I_pad) and wd_t.shape == (I_pad, H)

    M = 1
    for d in orig_shape[:-1]:
        M *= int(d)
    x2d = x.astype(compute_dtype).reshape(M, hidden)

    c_bytes = np.dtype(compute_dtype).itemsize
    sub = 16 if c_bytes == 2 else 8
    if tm is None:
        tm = defaults["tm"]
    tm = _round_up(max(sub, min(tm, _round_up(M, sub))), sub)
    Mp = _round_up(M, tm)
    xp = jnp.pad(x2d, ((0, Mp - M), (0, H - hidden)))

    n_row_tiles = Mp // tm
    n_i_total = I_pad // ti

    # Core split over the I reduction: keeps both TensorCores of a v7x chip busy
    # for decode-shaped inputs (single row tile) and halves per-core weight
    # traffic.  Each split writes an f32 partial that is summed outside.
    if num_core_splits is None:
        num_core_splits = (defaults["cores_per_chip"]
                           if (n_row_tiles == 1 and n_i_total >= 2) else 1)
    if num_core_splits < 1 or n_i_total % num_core_splits != 0:
        num_core_splits = 1
    n_i = n_i_total // num_core_splits
    partial_dtype = jnp.float32 if num_core_splits > 1 else out_dtype
    o_bytes = np.dtype(partial_dtype).itemsize

    # Explicit, tile-derived scoped-VMEM budget: double-buffered x/out tiles,
    # the weight stream, the f32 accumulator and the live f32 g/u/h temporaries
    # (+ headroom), capped per generation.
    if vmem_limit_bytes is None:
        need = (2 * tm * H * c_bytes                                   # x double buffer
                + max(2, weight_buffer_count) * 3 * H * ti * c_bytes   # weight stream
                + 2 * tm * H * o_bytes                                 # out double buffer
                + tm * H * 4                                           # f32 accumulator
                + 4 * tm * ti * 4)                                     # g/u/h f32 temps
        vmem_limit_bytes = int(min(defaults["vmem_cap"],
                                   max(need + (8 << 20), 48 << 20)))

    def x_map(c, i, j):
        return (i, 0)

    def gu_col_map(c, i, j):
        return (0, c * n_i + j)

    def wd_map(c, i, j):
        return (c * n_i + j, 0)

    def o_map(c, i, j):
        return (c, i, 0)

    def w_spec(shape, imap):
        if weight_buffer_count != 2:
            # Deeper weight buffering hides DMA jitter on 128-MiB-VMEM parts.
            return pl.BlockSpec(shape, imap,
                                pipeline_mode=pl.Buffered(weight_buffer_count))
        return pl.BlockSpec(shape, imap)

    cost = pl.CostEstimate(
        flops=int(6 * Mp * I_pad * H),
        transcendentals=int(Mp * I_pad),
        bytes_accessed=int(n_row_tiles * 3 * H * I_pad * c_bytes
                           + num_core_splits * Mp * H * (c_bytes + o_bytes)),
    )

    partials = pl.pallas_call(
        _llama_mlp_kernel,
        out_shape=jax.ShapeDtypeStruct((num_core_splits, Mp, H), partial_dtype),
        grid_spec=pltpu.PrefetchScalarGridSpec(
            num_scalar_prefetch=0,
            grid=(num_core_splits, n_row_tiles, n_i),
            in_specs=[
                pl.BlockSpec((tm, H), x_map),        # activation rows (resident)
                w_spec((H, ti), gu_col_map),         # gate_proj^T stream
                w_spec((H, ti), gu_col_map),         # up_proj^T stream
                w_spec((ti, H), wd_map),             # down_proj^T stream
            ],
            out_specs=pl.BlockSpec((None, tm, H), o_map),
            scratch_shapes=[pltpu.VMEM((tm, H), jnp.float32)],
        ),
        compiler_params=pltpu.CompilerParams(
            dimension_semantics=("parallel", "parallel", "arbitrary"),
            vmem_limit_bytes=vmem_limit_bytes,
        ),
        cost_estimate=cost,
    )(xp, wg_t, wu_t, wd_t)

    if num_core_splits > 1:
        out2d = partials.sum(axis=0).astype(out_dtype)
    else:
        out2d = partials.reshape(Mp, H)
    return out2d[:M, :hidden].reshape(*orig_shape[:-1], hidden)


def llama_mlp(x, w_gate, w_up, w_down, *, tm=None, ti=None, compute_dtype=None,
              out_dtype=None, num_core_splits=None, vmem_limit_bytes=None,
              weight_buffer_count=2):
    """Convenience wrapper.  x: (..., hidden).  Weights in PyTorch nn.Linear
    convention: w_gate, w_up: (intermediate, hidden); w_down: (hidden, intermediate).

    bf16 compute is the default for f32 inputs (f32 accumulation kept).  This
    wrapper repacks the weights on every call; for production, call
    prepare_llama_mlp_weights() once at load time and use llama_mlp_prepared().
    """
    if compute_dtype is None:
        compute_dtype = jnp.bfloat16 if x.dtype == jnp.float32 else x.dtype
    wg_t, wu_t, wd_t, ti = prepare_llama_mlp_weights(
        w_gate, w_up, w_down, ti=ti, compute_dtype=compute_dtype)
    return llama_mlp_prepared(
        x, wg_t, wu_t, wd_t, ti=ti, tm=tm, out_dtype=out_dtype,
        num_core_splits=num_core_splits, vmem_limit_bytes=vmem_limit_bytes,
        weight_buffer_count=weight_buffer_count)


def llama_mlp_ref(x, w_gate, w_up, w_down):
    """Pure-JAX reference matching the PyTorch forward (pretraining_tp=1;
    the tp>1 branch is mathematically identical)."""
    g = jnp.einsum("...h,ih->...i", x, w_gate)
    u = jnp.einsum("...h,ih->...i", x, w_up)
    h = jax.nn.silu(g) * u
    return jnp.einsum("...i,hi->...h", h, w_down)


if __name__ == "__main__":
    # config: hidden_size=32, intermediate_size=64, mlp_bias=False,
    # hidden_act="silu", pretraining_tp=1
    key = jax.random.PRNGKey(0)

    # --- Test 1: module-sized shapes, default (bf16-compute) path ------------
    batch, seq, hidden, intermediate = 2, 8, 32, 64
    kx, kg, ku, kd = jax.random.split(key, 4)
    x = jax.random.normal(kx, (batch, seq, hidden), jnp.float32)
    # PyTorch nn.Linear weight shape convention: (out_features, in_features)
    w_gate = jax.random.normal(kg, (intermediate, hidden), jnp.float32) * 0.05
    w_up = jax.random.normal(ku, (intermediate, hidden), jnp.float32) * 0.05
    w_down = jax.random.normal(kd, (hidden, intermediate), jnp.float32) * 0.05

    ref = llama_mlp_ref(x, w_gate, w_up, w_down)

    out_bf16 = jax.block_until_ready(llama_mlp(x, w_gate, w_up, w_down))
    assert out_bf16.shape == (batch, seq, hidden)
    assert out_bf16.dtype == x.dtype
    assert jnp.allclose(out_bf16, ref, atol=2e-2, rtol=2e-2), "bf16 path mismatch"

    # --- Test 2: same shapes, exact f32 compute path --------------------------
    out_f32 = jax.block_until_ready(
        llama_mlp(x, w_gate, w_up, w_down, compute_dtype=jnp.float32))
    assert jnp.allclose(out_f32, ref, atol=1e-4, rtol=1e-4), "f32 path mismatch"

    # --- Test 3: multi-I-tile reduction + core-split partial-sum path ---------
    b2, s2, h2, i2 = 2, 64, 128, 512
    k2 = jax.random.split(key, 5)
    x2 = jax.random.normal(k2[0], (b2, s2, h2), jnp.float32)
    wg2 = jax.random.normal(k2[1], (i2, h2), jnp.float32) * 0.02
    wu2 = jax.random.normal(k2[2], (i2, h2), jnp.float32) * 0.02
    wd2 = jax.random.normal(k2[3], (h2, i2), jnp.float32) * 0.02
    ref2 = llama_mlp_ref(x2, wg2, wu2, wd2)
    out2 = jax.block_until_ready(
        llama_mlp(x2, wg2, wu2, wd2, ti=128, num_core_splits=2,
                  compute_dtype=jnp.float32))
    assert out2.shape == (b2, s2, h2)
    assert jnp.allclose(out2, ref2, atol=2e-3, rtol=2e-3), "core-split path mismatch"

    print("KERNEL_OK")
</pallas_src>

<mosaic_0001>
module attributes {stable_mosaic.version = 11 : i64} {
  func.func @_llama_mlp_kernel(%arg0: i32, %arg1: i32, %arg2: i32, %arg3: memref<16x128xbf16, #tpu.memory_space<vmem>>, %arg4: memref<128x128xbf16, #tpu.memory_space<vmem>>, %arg5: memref<128x128xbf16, #tpu.memory_space<vmem>>, %arg6: memref<128x128xbf16, #tpu.memory_space<vmem>>, %arg7: memref<1x16x128xf32, #tpu.memory_space<vmem>>, %arg8: memref<16x128xf32, #tpu.memory_space<vmem>>) attributes {dimension_semantics = [#tpu.dimension_semantics<parallel>, #tpu.dimension_semantics<parallel>, #tpu.dimension_semantics<arbitrary>], iteration_bounds = array<i64: 1, 1, 1>, scalar_prefetch = 0 : i64, scratch_operands = 1 : i64, tpu.core_type = #tpu.core_type<tc>, window_params = [{transform_indices = @transform_0, window_bounds = array<i64: 16, 128>}, {transform_indices = @transform_1, window_bounds = array<i64: 128, 128>}, {transform_indices = @transform_2, window_bounds = array<i64: 128, 128>}, {transform_indices = @transform_3, window_bounds = array<i64: 128, 128>}, {transform_indices = @transform_4, window_bounds = array<i64: 1, 16, 128>}]} {
    %c0_i32 = arith.constant 0 : i32
    %0 = arith.cmpi eq, %arg2, %c0_i32 : i32
    %1 = arith.extui %0 : i1 to i32
    %c0_i32_0 = arith.constant 0 : i32
    %2 = arith.cmpi ne, %1, %c0_i32_0 : i32
    scf.if %2 {
      %cst_17 = arith.constant 0.000000e+00 : f32
      %24 = vector.broadcast %cst_17 : f32 to vector<16x128xf32>
      %c0_18 = arith.constant 0 : index
      %c0_19 = arith.constant 0 : index
      %25 = vector.load %arg8[%c0_18, %c0_19] : memref<16x128xf32, #tpu.memory_space<vmem>>, vector<16x128xf32>
      tpu.vector_store %arg8[%c0_18, %c0_19], %24 {strides = array<i32>} : memref<16x128xf32, #tpu.memory_space<vmem>>, vector<16x128xf32>,
    } else {
    }
    %c0 = arith.constant 0 : index
    %c0_1 = arith.constant 0 : index
    %3 = vector.load %arg3[%c0, %c0_1] : memref<16x128xbf16, #tpu.memory_space<vmem>>, vector<16x128xbf16>
    %c0_2 = arith.constant 0 : index
    %c0_3 = arith.constant 0 : index
    %4 = vector.load %arg4[%c0_2, %c0_3] : memref<128x128xbf16, #tpu.memory_space<vmem>>, vector<128x128xbf16>
    %cst = arith.constant dense<0.000000e+00> : vector<16x128xf32>
    %5 = tpu.matmul %3, %4, %cst {dimension_numbers = #tpu.dot_dimension_numbers<[1], [0], [0], [1], [0, 0, 1, 1], [], []>} : vector<16x128xbf16>, vector<128x128xbf16>, vector<16x128xf32> -> vector<16x128xf32>
    %c0_4 = arith.constant 0 : index
    %c0_5 = arith.constant 0 : index
    %6 = vector.load %arg5[%c0_4, %c0_5] : memref<128x128xbf16, #tpu.memory_space<vmem>>, vector<128x128xbf16>
    %cst_6 = arith.constant dense<0.000000e+00> : vector<16x128xf32>
    %7 = tpu.matmul %3, %6, %cst_6 {dimension_numbers = #tpu.dot_dimension_numbers<[1], [0], [0], [1], [0, 0, 1, 1], [], []>} : vector<16x128xbf16>, vector<128x128xbf16>, vector<16x128xf32> -> vector<16x128xf32>
    %8 = arith.negf %5 : vector<16x128xf32>
    %9 = math.exp %8 : vector<16x128xf32>
    %cst_7 = arith.constant 1.000000e+00 : f32
    %10 = vector.broadcast %cst_7 : f32 to vector<16x128xf32>
    %11 = arith.addf %10, %9 : vector<16x128xf32>
    %12 = arith.divf %10, %11 : vector<16x128xf32>
    %13 = arith.mulf %5, %12 : vector<16x128xf32>
    %14 = arith.mulf %13, %7 : vector<16x128xf32>
    %c0_8 = arith.constant 0 : index
    %c0_9 = arith.constant 0 : index
    %15 = vector.load %arg8[%c0_8, %c0_9] : memref<16x128xf32, #tpu.memory_space<vmem>>, vector<16x128xf32>
    %16 = arith.truncf %14 : vector<16x128xf32> to vector<16x128xbf16>
    %c0_10 = arith.constant 0 : index
    %c0_11 = arith.constant 0 : index
    %17 = vector.load %arg6[%c0_10, %c0_11] : memref<128x128xbf16, #tpu.memory_space<vmem>>, vector<128x128xbf16>
    %cst_12 = arith.constant dense<0.000000e+00> : vector<16x128xf32>
    %18 = tpu.matmul %16, %17, %cst_12 {dimension_numbers = #tpu.dot_dimension_numbers<[1], [0], [0], [1], [0, 0, 1, 1], [], []>} : vector<16x128xbf16>, vector<128x128xbf16>, vector<16x128xf32> -> vector<16x128xf32>
    %19 = arith.addf %15, %18 : vector<16x128xf32>
    %c0_13 = arith.constant 0 : index
    %c0_14 = arith.constant 0 : index
    %20 = vector.load %arg8[%c0_13, %c0_14] : memref<16x128xf32, #tpu.memory_space<vmem>>, vector<16x128xf32>
    tpu.vector_store %arg8[%c0_13, %c0_14], %19 {strides = array<i32>} : memref<16x128xf32, #tpu.memory_space<vmem>>, vector<16x128xf32>,
    %c0_i32_15 = arith.constant 0 : i32
    %21 = arith.cmpi eq, %arg2, %c0_i32_15 : i32
    %22 = arith.extui %21 : i1 to i32
    %c0_i32_16 = arith.constant 0 : i32
    %23 = arith.cmpi ne, %22, %c0_i32_16 : i32
    scf.if %23 {
      %c0_17 = arith.constant 0 : index
      %c0_18 = arith.constant 0 : index
      %24 = vector.load %arg8[%c0_17, %c0_18] : memref<16x128xf32, #tpu.memory_space<vmem>>, vector<16x128xf32>
      %c0_19 = arith.constant 0 : index
      %c0_20 = arith.constant 0 : index
      %c0_21 = arith.constant 0 : index
      %25 = vector.load %arg7[%c0_19, %c0_20, %c0_21] : memref<1x16x128xf32, #tpu.memory_space<vmem>>, vector<1x16x128xf32>
      %26 = vector.shape_cast %25 : vector<1x16x128xf32> to vector<16x128xf32>
      %27 = vector.shape_cast %24 : vector<16x128xf32> to vector<1x16x128xf32>
      tpu.vector_store %arg7[%c0_19, %c0_20, %c0_21], %27 {strides = array<i32>} : memref<1x16x128xf32, #tpu.memory_space<vmem>>, vector<1x16x128xf32>,
    } else {
    }
    return
  }
  func.func @transform_0(%arg0: i32, %arg1: i32, %arg2: i32) -> (i32, i32) {
    %c0_i32 = arith.constant 0 : i32
    %c0_i32_0 = arith.constant 0 : i32
    return %arg1, %c0_i32 : i32, i32
  }
  func.func @transform_1(%arg0: i32, %arg1: i32, %arg2: i32) -> (i32, i32) {
    %c1_i32 = arith.constant 1 : i32
    %0 = arith.muli %arg0, %c1_i32 : i32
    %1 = arith.addi %0, %arg2 : i32
    %c0_i32 = arith.constant 0 : i32
    %c0_i32_0 = arith.constant 0 : i32
    return %c0_i32, %1 : i32, i32
  }
  func.func @transform_2(%arg0: i32, %arg1: i32, %arg2: i32) -> (i32, i32) {
    %c1_i32 = arith.constant 1 : i32
    %0 = arith.muli %arg0, %c1_i32 : i32
    %1 = arith.addi %0, %arg2 : i32
    %c0_i32 = arith.constant 0 : i32
    %c0_i32_0 = arith.constant 0 : i32
    return %c0_i32, %1 : i32, i32
  }
  func.func @transform_3(%arg0: i32, %arg1: i32, %arg2: i32) -> (i32, i32) {
    %c1_i32 = arith.constant 1 : i32
    %0 = arith.muli %arg0, %c1_i32 : i32
    %1 = arith.addi %0, %arg2 : i32
    %c0_i32 = arith.constant 0 : i32
    %c0_i32_0 = arith.constant 0 : i32
    return %1, %c0_i32 : i32, i32
  }
  func.func @transform_4(%arg0: i32, %arg1: i32, %arg2: i32) -> (i32, i32, i32) {
    %c0_i32 = arith.constant 0 : i32
    %c0_i32_0 = arith.constant 0 : i32
    return %arg0, %arg1, %c0_i32 : i32, i32, i32
  }
}

</mosaic_0001>

<llo_original>
// kernel: tpu_custom_call.1
$region0: #{tpu_custom_call.1}
  #allocation0 [shape = 'u32[]', space=smem, size = 0x4, offset = 0x4, fixed_abs, tag = 'smem constant byte address 0x4 - core index']
  #allocation1 [shape = 'u32[144,128]{1,0:T(1,128)}', space=vmem, size = 0x12000, scoped, tag = 'internal scratch']
  #allocation2 [shape = 'f32[16,128]{1,0:T(8,128)}', space=vmem, size = 0x2000, scoped, tag = 'scratch operand']
  %s0 = inlined_call_operand.hbm [shape: bf16[16,128], index: 0, kind: input, shape index: {}]
  %s1 = inlined_call_operand.hbm [shape: bf16[128,128], index: 1, kind: input, shape index: {}]
  %s2 = inlined_call_operand.hbm [shape: bf16[128,128], index: 2, kind: input, shape index: {}]
  %s3 = inlined_call_operand.hbm [shape: bf16[128,128], index: 3, kind: input, shape index: {}]
  %s4 = inlined_call_operand.hbm [shape: f32[1,16,128], index: 4, kind: output, shape index: {}]
  %s5 = sld [smem:[#allocation0]]
  $region50: #{tpu_custom_call.1} parent=0
    _
  %s7 = ssub.s32 1, %s5
  %s8 = scalar_select 0, %s7, %s5
  $region1: #{tpu_custom_call.1} parent=0
    #allocation3 [shape = 'u8[4096]{0}', space=vmem, size = 0x1000, scoped, tag = 'input window, operand 0, single buffered']
    #allocation4 [shape = 's32[1]{0}', space=sflag, size = 0x4, scoped, tag = 'scoped memory for tpu_custom_call.1']
    #allocation5 [shape = 's32[1]{0}', space=sflag, size = 0x4, scoped, tag = 'scoped memory for tpu_custom_call.1']
    #allocation6 [shape = 'u8[32768]{0}', space=vmem, size = 0x8000, scoped, tag = 'input window, operand 1, single buffered']
    #allocation7 [shape = 's32[1]{0}', space=sflag, size = 0x4, scoped, tag = 'scoped memory for tpu_custom_call.1']
    #allocation8 [shape = 'u8[32768]{0}', space=vmem, size = 0x8000, scoped, tag = 'input window, operand 2, single buffered']
    #allocation9 [shape = 'u8[32768]{0}', space=vmem, size = 0x8000, scoped, tag = 'input window, operand 3, single buffered']
    #allocation10 [shape = 's32[1]{0}', space=sflag, size = 0x4, scoped, tag = 'scoped memory for tpu_custom_call.1']
    #allocation11 [shape = 'u8[8192]{0}', space=vmem, size = 0x2000, scoped, tag = 'output window, operand 0, single buffered']
    %9 = vsyncpa [#allocation4], 0
    %10 = vsyncpa [#allocation7], 0
    %11 = vsyncpa [#allocation10], 0
    %12 = vsyncpa [#allocation5], 0
    // Predicated region
    $region2: #{tpu_custom_call.1} parent=1 // pred_check
      _
    $region3: #{tpu_custom_call.1} parent=1 // pred_check_branch
      %14 = sbr.rel (0) target = $region5
    $region4: #{tpu_custom_call.1} parent=1 // pred_region
      %s16 = ssub.s32 128, 128
      %17 = vsyncadd [#allocation4], %s16
      %s18 = sshll.u32 [#allocation3], 4
      %s19 = int_to_ptr.vmem [resolvable:$true] %s18
      %24 = dma.hbm_to_vmem [thread:$0]  %s0, 128, %s19, [#allocation4], 64, 64, 4
    $region5: #{tpu_custom_call.1} parent=1 // pred_fallthru
      _
    // Predicated region
    $region6: #{tpu_custom_call.1} parent=1 // pred_check
      _
    $region7: #{tpu_custom_call.1} parent=1 // pred_check_branch
      %26 = sbr.rel (0) target = $region9
    $region8: #{tpu_custom_call.1} parent=1 // pred_region
      %s27 = sadd.s32 0, 0
      %s29 = ssub.s32 1024, 1024
      %30 = vsyncadd [#allocation7], %s29
      %s31 = smul.addr %s27, 64
      %s32 = scalar_lea.hbm %s1, %s31
      %s33 = sshll.u32 [#allocation6], 4
      %s34 = int_to_ptr.vmem [resolvable:$true] %s33
      %39 = dma.hbm_to_vmem [thread:$0]  %s32, 1024, %s34, [#allocation7], 64, 64, 4
    $region9: #{tpu_custom_call.1} parent=1 // pred_fallthru
      _
    // Predicated region
    $region10: #{tpu_custom_call.1} parent=1 // pred_check
      _
    $region11: #{tpu_custom_call.1} parent=1 // pred_check_branch
      %41 = sbr.rel (0) target = $region13
    $region12: #{tpu_custom_call.1} parent=1 // pred_region
      %s42 = sadd.s32 0, 0
      %s44 = ssub.s32 1024, 1024
      %45 = vsyncadd [#allocation7], %s44
      %s46 = smul.addr %s42, 64
      %s47 = scalar_lea.hbm %s2, %s46
      %s48 = sshll.u32 [#allocation8], 4
      %s49 = int_to_ptr.vmem [resolvable:$true] %s48
      %54 = dma.hbm_to_vmem [thread:$0]  %s47, 1024, %s49, [#allocation7], 64, 64, 4
    $region13: #{tpu_custom_call.1} parent=1 // pred_fallthru
      _
    // Predicated region
    $region14: #{tpu_custom_call.1} parent=1 // pred_check
      _
    $region15: #{tpu_custom_call.1} parent=1 // pred_check_branch
      %56 = sbr.rel (0) target = $region17
    $region16: #{tpu_custom_call.1} parent=1 // pred_region
      %s57 = sadd.s32 0, 0
      %s58 = smul.u32 16, %s57
      %s60 = ssub.s32 1024, 1024
      %61 = vsyncadd [#allocation10], %s60
      %s62 = smul.addr %s58, 64
      %s63 = scalar_lea.hbm %s3, %s62
      %s64 = sshll.u32 [#allocation9], 4
      %s65 = int_to_ptr.vmem [resolvable:$true] %s64
      %70 = dma.hbm_to_vmem [thread:$0]  %s63, 1024, %s65, [#allocation10], 64, 64, 4
    $region17: #{tpu_custom_call.1} parent=1 // pred_fallthru
      _
    // Predicated region
    $region18: #{tpu_custom_call.1} parent=1 // pred_check
      _
    $region19: #{tpu_custom_call.1} parent=1 // pred_check_branch
      %72 = sbr.rel (0) target = $region21
    $region20: #{tpu_custom_call.1} parent=1 // pred_region
      %73 = dma.done [#allocation4], 128
    $region21: #{tpu_custom_call.1} parent=1 // pred_fallthru
      _
    // Predicated region
    $region22: #{tpu_custom_call.1} parent=1 // pred_check
      _
    $region23: #{tpu_custom_call.1} parent=1 // pred_check_branch
      %75 = sbr.rel (0) target = $region25
    $region24: #{tpu_custom_call.1} parent=1 // pred_region
      %76 = dma.done [#allocation7], 1024
    $region25: #{tpu_custom_call.1} parent=1 // pred_fallthru
      _
    // Predicated region
    $region26: #{tpu_custom_call.1} parent=1 // pred_check
      _
    $region27: #{tpu_custom_call.1} parent=1 // pred_check_branch
      %78 = sbr.rel (0) target = $region29
    $region28: #{tpu_custom_call.1} parent=1 // pred_region
      %79 = dma.done [#allocation7], 1024
    $region29: #{tpu_custom_call.1} parent=1 // pred_fallthru
      _
    // Predicated region
    $region30: #{tpu_custom_call.1} parent=1 // pred_check
      _
    $region31: #{tpu_custom_call.1} parent=1 // pred_check_branch
      %81 = sbr.rel (0) target = $region33
    $region32: #{tpu_custom_call.1} parent=1 // pred_region
      %82 = dma.done [#allocation10], 1024
    $region33: #{tpu_custom_call.1} parent=1 // pred_fallthru
      _
    %s83 = sadd.s32 0, 0
    %s84 = sadd.s32 0, 0
    %s85 = sadd.s32 0, 0
    %s86 = smul.u32 16, %s85
    %p88 = scmp.eq.s32.totalorder 0, 0
    // Predicated region
    $region34: #{tpu_custom_call.1} parent=1 // pred_check
      %p89 = pneg %p88
    $region35: #{tpu_custom_call.1} parent=1 // pred_check_branch
      %91 = sbr.rel (%p89) target = $region37
    $region36: #{tpu_custom_call.1} parent=1 // pred_region
      %92 = vst [vmem:[#allocation2] sm:$0xff] 0.0
      %93 = vst [vmem:[#allocation2 + $0x8] sm:$0xff] 0.0
    $region37: #{tpu_custom_call.1} parent=1 // pred_fallthru
      _
    %v94 = vld [vmem:[#allocation3] sm:$0xf]
    %v95 = vld [vmem:[#allocation3 + $0x4] sm:$0xf]
    %v96 = vld [vmem:[#allocation6] sm:$0xf]
    %v97 = vld [vmem:[#allocation6 + $0x4] sm:$0xf]
    %v98 = vld [vmem:[#allocation6 + $0x8] sm:$0xf]
    %v99 = vld [vmem:[#allocation6 + $0xc] sm:$0xf]
    %v100 = vld [vmem:[#allocation6 + $0x10] sm:$0xf]
    %v101 = vld [vmem:[#allocation6 + $0x14] sm:$0xf]
    %v102 = vld [vmem:[#allocation6 + $0x18] sm:$0xf]
    %v103 = vld [vmem:[#allocation6 + $0x1c] sm:$0xf]
    %v104 = vld [vmem:[#allocation6 + $0x20] sm:$0xf]
    %v105 = vld [vmem:[#allocation6 + $0x24] sm:$0xf]
    %v106 = vld [vmem:[#allocation6 + $0x28] sm:$0xf]
    %v107 = vld [vmem:[#allocation6 + $0x2c] sm:$0xf]
    %v108 = vld [vmem:[#allocation6 + $0x30] sm:$0xf]
    %v109 = vld [vmem:[#allocation6 + $0x34] sm:$0xf]
    %v110 = vld [vmem:[#allocation6 + $0x38] sm:$0xf]
    %v111 = vld [vmem:[#allocation6 + $0x3c] sm:$0xf]
    %v114 = vunpack.c.l.b16 %v94
    %v115 = vunpack.c.l.b16 %v95
    %v116 = vpack.c.b16 %v115, %v114
    %v134 = vunpack.c.l.b16 %v96
    %v135 = vunpack.c.l.b16 %v97
    %v136 = vunpack.c.l.b16 %v98
    %v137 = vunpack.c.l.b16 %v99
    %v138 = vunpack.c.l.b16 %v100
    %v139 = vunpack.c.l.b16 %v101
    %v140 = vunpack.c.l.b16 %v102
    %v141 = vunpack.c.l.b16 %v103
    %v142 = vunpack.c.l.b16 %v104
    %v143 = vunpack.c.l.b16 %v105
    %v144 = vunpack.c.l.b16 %v106
    %v145 = vunpack.c.l.b16 %v107
    %v146 = vunpack.c.l.b16 %v108
    %v147 = vunpack.c.l.b16 %v109
    %v148 = vunpack.c.l.b16 %v110
    %v149 = vunpack.c.l.b16 %v111
    %v150 = vpack.c.b16 %v135, %v134
    %v151 = vpack.c.b16 %v137, %v136
    %v152 = vpack.c.b16 %v139, %v138
    %v153 = vpack.c.b16 %v141, %v140
    %v154 = vpack.c.b16 %v143, %v142
    %v155 = vpack.c.b16 %v145, %v144
    %v156 = vpack.c.b16 %v147, %v146
    %v157 = vpack.c.b16 %v149, %v148
    %166 = vmatprep.subr.bf16.mxu0 0
    %167 = vmatpush1.bf16.msra.mxu0 %v150
    %168 = vmatprep.subr.bf16.mxu0 0
    %169 = vmatpush1.bf16.msra.mxu0 %v151
    %170 = vmatprep.subr.bf16.mxu0 0
    %171 = vmatpush1.bf16.msra.mxu0 %v152
    %172 = vmatprep.subr.bf16.mxu0 0
    %173 = vmatpush1.bf16.msra.mxu0 %v153
    %174 = vmatprep.subr.bf16.mxu0 0
    %175 = vmatpush1.bf16.msra.mxu0 %v154
    %176 = vmatprep.subr.bf16.mxu0 0
    %177 = vmatpush1.bf16.msra.mxu0 %v155
    %178 = vmatprep.subr.bf16.mxu0 0
    %179 = vmatpush1.bf16.msra.mxu0 %v156
    %180 = vmatprep.subr.bf16.mxu0 0
    %181 = vmatpush1.bf16.msra.mxu0 %v157
    %182 = vmatprep.subr.bf16.mxu0 0
    %183 = vmatpush1.bf16.msra.mxu0 0
    %184 = vmatprep.subr.bf16.mxu0 0
    %185 = vmatpush1.bf16.msra.mxu0 0
    %186 = vmatprep.subr.bf16.mxu0 0
    %187 = vmatpush1.bf16.msra.mxu0 0
    %188 = vmatprep.subr.bf16.mxu0 0
    %189 = vmatpush1.bf16.msra.mxu0 0
    %190 = vmatprep.subr.bf16.mxu0 0
    %191 = vmatpush1.bf16.msra.mxu0 0
    %192 = vmatprep.subr.bf16.mxu0 0
    %193 = vmatpush1.bf16.msra.mxu0 0
    %194 = vmatprep.subr.bf16.mxu0 0
    %195 = vmatpush1.bf16.msra.mxu0 0
    %196 = vmatprep.subr.bf16.mxu0 0
    %197 = vmatpush1.bf16.msra.mxu0 0
    %198 = vmatprep.mubr.bf16.mxu0 0
    %199 = vmatmul.mubr.bf16.gmra.mrb[0].mxu0 %v116
    %v200 = vpop.f32.mrb[0].mxu0
    %v201 = vadd.f32 0.0, %v200
    %v202 = vpop.f32.mrb[0].mxu0
    %v203 = vpop.f32.mrb[0].mxu0
    %v204 = vadd.f32 0.0, %v203
    %v205 = vpop.f32.mrb[0].mxu0
    %206 = vdwg.mxu0
    %v207 = vld [vmem:[#allocation8] sm:$0xf]
    %v208 = vld [vmem:[#allocation8 + $0x4] sm:$0xf]
    %v209 = vld [vmem:[#allocation8 + $0x8] sm:$0xf]
    %v210 = vld [vmem:[#allocation8 + $0xc] sm:$0xf]
    %v211 = vld [vmem:[#allocation8 + $0x10] sm:$0xf]
    %v212 = vld [vmem:[#allocation8 + $0x14] sm:$0xf]
    %v213 = vld [vmem:[#allocation8 + $0x18] sm:$0xf]
    %v214 = vld [vmem:[#allocation8 + $0x1c] sm:$0xf]
    %v215 = vld [vmem:[#allocation8 + $0x20] sm:$0xf]
    %v216 = vld [vmem:[#allocation8 + $0x24] sm:$0xf]
    %v217 = vld [vmem:[#allocation8 + $0x28] sm:$0xf]
    %v218 = vld [vmem:[#allocation8 + $0x2c] sm:$0xf]
    %v219 = vld [vmem:[#allocation8 + $0x30] sm:$0xf]
    %v220 = vld [vmem:[#allocation8 + $0x34] sm:$0xf]
    %v221 = vld [vmem:[#allocation8 + $0x38] sm:$0xf]
    %v222 = vld [vmem:[#allocation8 + $0x3c] sm:$0xf]
    %v239 = vunpack.c.l.b16 %v207
    %v240 = vunpack.c.l.b16 %v208
    %v241 = vunpack.c.l.b16 %v209
    %v242 = vunpack.c.l.b16 %v210
    %v243 = vunpack.c.l.b16 %v211
    %v244 = vunpack.c.l.b16 %v212
    %v245 = vunpack.c.l.b16 %v213
    %v246 = vunpack.c.l.b16 %v214
    %v247 = vunpack.c.l.b16 %v215
    %v248 = vunpack.c.l.b16 %v216
    %v249 = vunpack.c.l.b16 %v217
    %v250 = vunpack.c.l.b16 %v218
    %v251 = vunpack.c.l.b16 %v219
    %v252 = vunpack.c.l.b16 %v220
    %v253 = vunpack.c.l.b16 %v221
    %v254 = vunpack.c.l.b16 %v222
    %v255 = vpack.c.b16 %v240, %v239
    %v256 = vpack.c.b16 %v242, %v241
    %v257 = vpack.c.b16 %v244, %v243
    %v258 = vpack.c.b16 %v246, %v245
    %v259 = vpack.c.b16 %v248, %v247
    %v260 = vpack.c.b16 %v250, %v249
    %v261 = vpack.c.b16 %v252, %v251
    %v262 = vpack.c.b16 %v254, %v253
    %271 = vmatprep.subr.bf16.mxu0 0
    %272 = vmatpush1.bf16.msra.mxu0 %v255
    %273 = vmatprep.subr.bf16.mxu0 0
    %274 = vmatpush1.bf16.msra.mxu0 %v256
    %275 = vmatprep.subr.bf16.mxu0 0
    %276 = vmatpush1.bf16.msra.mxu0 %v257
    %277 = vmatprep.subr.bf16.mxu0 0
    %278 = vmatpush1.bf16.msra.mxu0 %v258
    %279 = vmatprep.subr.bf16.mxu0 0
    %280 = vmatpush1.bf16.msra.mxu0 %v259
    %281 = vmatprep.subr.bf16.mxu0 0
    %282 = vmatpush1.bf16.msra.mxu0 %v260
    %283 = vmatprep.subr.bf16.mxu0 0
    %284 = vmatpush1.bf16.msra.mxu0 %v261
    %285 = vmatprep.subr.bf16.mxu0 0
    %286 = vmatpush1.bf16.msra.mxu0 %v262
    %287 = vmatprep.subr.bf16.mxu0 0
    %288 = vmatpush1.bf16.msra.mxu0 0
    %289 = vmatprep.subr.bf16.mxu0 0
    %290 = vmatpush1.bf16.msra.mxu0 0
    %291 = vmatprep.subr.bf16.mxu0 0
    %292 = vmatpush1.bf16.msra.mxu0 0
    %293 = vmatprep.subr.bf16.mxu0 0
    %294 = vmatpush1.bf16.msra.mxu0 0
    %295 = vmatprep.subr.bf16.mxu0 0
    %296 = vmatpush1.bf16.msra.mxu0 0
    %297 = vmatprep.subr.bf16.mxu0 0
    %298 = vmatpush1.bf16.msra.mxu0 0
    %299 = vmatprep.subr.bf16.mxu0 0
    %300 = vmatpush1.bf16.msra.mxu0 0
    %301 = vmatprep.subr.bf16.mxu0 0
    %302 = vmatpush1.bf16.msra.mxu0 0
    %303 = vmatprep.mubr.bf16.mxu0 0
    %304 = vmatmul.mubr.bf16.gmra.mrb[0].mxu0 %v116
    %v305 = vpop.f32.mrb[0].mxu0
    %v306 = vadd.f32 0.0, %v305
    %v307 = vpop.f32.mrb[0].mxu0
    %v308 = vpop.f32.mrb[0].mxu0
    %v309 = vadd.f32 0.0, %v308
    %v310 = vpop.f32.mrb[0].mxu0
    %311 = vdwg.mxu0
    %v312 = vxor.u32 %v201, 2147483648
    %v313 = vxor.u32 %v204, 2147483648
    %v314 = vmul.f32 %v312, 1.442695
    %v315 = vpow.pop %v314
    %v316 = vmul.f32 %v313, 1.442695
    %v317 = vpow.pop %v316
    %v318 = vadd.f32 %v315, 1.0
    %v319 = vadd.f32 %v317, 1.0
    %v320 = vrcp.pop %v318
    %v321 = vmul.f32 1.0, %v320
    %v322 = vrcp.pop %v319
    %v323 = vmul.f32 1.0, %v322
    %v324 = vmul.f32 %v201, %v321
    %v325 = vmul.f32 %v204, %v323
    %v326 = vmul.f32 %v324, %v306
    %v327 = vmul.f32 %v325, %v309
    %v328 = vld [vmem:[#allocation2] sm:$0xff]
    %v329 = vld [vmem:[#allocation2 + $0x8] sm:$0xff]
    %v330 = vpack.c.bf16 %v327, %v326
    %v331 = vld [vmem:[#allocation9] sm:$0xf]
    %v332 = vld [vmem:[#allocation9 + $0x4] sm:$0xf]
    %v333 = vld [vmem:[#allocation9 + $0x8] sm:$0xf]
    %v334 = vld [vmem:[#allocation9 + $0xc] sm:$0xf]
    %v335 = vld [vmem:[#allocation9 + $0x10] sm:$0xf]
    %v336 = vld [vmem:[#allocation9 + $0x14] sm:$0xf]
    %v337 = vld [vmem:[#allocation9 + $0x18] sm:$0xf]
    %v338 = vld [vmem:[#allocation9 + $0x1c] sm:$0xf]
    %v339 = vld [vmem:[#allocation9 + $0x20] sm:$0xf]
    %v340 = vld [vmem:[#allocation9 + $0x24] sm:$0xf]
    %v341 = vld [vmem:[#allocation9 + $0x28] sm:$0xf]
    %v342 = vld [vmem:[#allocation9 + $0x2c] sm:$0xf]
    %v343 = vld [vmem:[#allocation9 + $0x30] sm:$0xf]
    %v344 = vld [vmem:[#allocation9 + $0x34] sm:$0xf]
    %v345 = vld [vmem:[#allocation9 + $0x38] sm:$0xf]
    %v346 = vld [vmem:[#allocation9 + $0x3c] sm:$0xf]
    %v363 = vunpack.c.l.b16 %v331
    %v364 = vunpack.c.l.b16 %v332
    %v365 = vunpack.c.l.b16 %v333
    %v366 = vunpack.c.l.b16 %v334
    %v367 = vunpack.c.l.b16 %v335
    %v368 = vunpack.c.l.b16 %v336
    %v369 = vunpack.c.l.b16 %v337
    %v370 = vunpack.c.l.b16 %v338
    %v371 = vunpack.c.l.b16 %v339
    %v372 = vunpack.c.l.b16 %v340
    %v373 = vunpack.c.l.b16 %v341
    %v374 = vunpack.c.l.b16 %v342
    %v375 = vunpack.c.l.b16 %v343
    %v376 = vunpack.c.l.b16 %v344
    %v377 = vunpack.c.l.b16 %v345
    %v378 = vunpack.c.l.b16 %v346
    %v379 = vpack.c.b16 %v364, %v363
    %v380 = vpack.c.b16 %v366, %v365
    %v381 = vpack.c.b16 %v368, %v367
    %v382 = vpack.c.b16 %v370, %v369
    %v383 = vpack.c.b16 %v372, %v371
    %v384 = vpack.c.b16 %v374, %v373
    %v385 = vpack.c.b16 %v376, %v375
    %v386 = vpack.c.b16 %v378, %v377
    %395 = vmatprep.subr.bf16.mxu0 0
    %396 = vmatpush1.bf16.msra.mxu0 %v379
    %397 = vmatprep.subr.bf16.mxu0 0
    %398 = vmatpush1.bf16.msra.mxu0 %v380
    %399 = vmatprep.subr.bf16.mxu0 0
    %400 = vmatpush1.bf16.msra.mxu0 %v381
    %401 = vmatprep.subr.bf16.mxu0 0
    %402 = vmatpush1.bf16.msra.mxu0 %v382
    %403 = vmatprep.subr.bf16.mxu0 0
    %404 = vmatpush1.bf16.msra.mxu0 %v383
    %405 = vmatprep.subr.bf16.mxu0 0
    %406 = vmatpush1.bf16.msra.mxu0 %v384
    %407 = vmatprep.subr.bf16.mxu0 0
    %408 = vmatpush1.bf16.msra.mxu0 %v385
    %409 = vmatprep.subr.bf16.mxu0 0
    %410 = vmatpush1.bf16.msra.mxu0 %v386
    %411 = vmatprep.subr.bf16.mxu0 0
    %412 = vmatpush1.bf16.msra.mxu0 0
    %413 = vmatprep.subr.bf16.mxu0 0
    %414 = vmatpush1.bf16.msra.mxu0 0
    %415 = vmatprep.subr.bf16.mxu0 0
    %416 = vmatpush1.bf16.msra.mxu0 0
    %417 = vmatprep.subr.bf16.mxu0 0
    %418 = vmatpush1.bf16.msra.mxu0 0
    %419 = vmatprep.subr.bf16.mxu0 0
    %420 = vmatpush1.bf16.msra.mxu0 0
    %421 = vmatprep.subr.bf16.mxu0 0
    %422 = vmatpush1.bf16.msra.mxu0 0
    %423 = vmatprep.subr.bf16.mxu0 0
    %424 = vmatpush1.bf16.msra.mxu0 0
    %425 = vmatprep.subr.bf16.mxu0 0
    %426 = vmatpush1.bf16.msra.mxu0 0
    %427 = vmatprep.mubr.bf16.mxu0 0
    %428 = vmatmul.mubr.bf16.gmra.mrb[0].mxu0 %v330
    %v429 = vpop.f32.mrb[0].mxu0
    %v430 = vadd.f32 0.0, %v429
    %v431 = vpop.f32.mrb[0].mxu0
    %v432 = vpop.f32.mrb[0].mxu0
    %v433 = vadd.f32 0.0, %v432
    %v434 = vpop.f32.mrb[0].mxu0
    %435 = vdwg.mxu0
    %v436 = vadd.f32 %v328, %v430
    %v437 = vadd.f32 %v329, %v433
    %438 = vst [vmem:[#allocation2] sm:$0xff] %v436
    %439 = vst [vmem:[#allocation2 + $0x8] sm:$0xff] %v437
    // Predicated region
    $region38: #{tpu_custom_call.1} parent=1 // pred_check
      %p440 = pneg %p88
    $region39: #{tpu_custom_call.1} parent=1 // pred_check_branch
      %442 = sbr.rel (%p440) target = $region41
    $region40: #{tpu_custom_call.1} parent=1 // pred_region
      %v443 = vld [vmem:[#allocation2] sm:$0xff]
      %v444 = vld [vmem:[#allocation2 + $0x8] sm:$0xff]
      %445 = vst [vmem:[#allocation11] sm:$0xff] %v443
      %446 = vst [vmem:[#allocation11 + $0x8] sm:$0xff] %v444
    $region41: #{tpu_custom_call.1} parent=1 // pred_fallthru
      _
    // Predicated region
    $region42: #{tpu_custom_call.1} parent=1 // pred_check
      _
    $region43: #{tpu_custom_call.1} parent=1 // pred_check_branch
      %448 = sbr.rel (0) target = $region45
    $region44: #{tpu_custom_call.1} parent=1 // pred_region
      %s450 = ssub.s32 256, 256
      %451 = vsyncadd [#allocation5], %s450
      %s452 = sshll.u32 [#allocation11], 4
      %s453 = int_to_ptr.vmem [resolvable:$true] %s452
      %458 = dma.vmem_to_hbm [thread:$0]  %s453, 256, %s4, [#allocation5], 128, 128, 8
    $region45: #{tpu_custom_call.1} parent=1 // pred_fallthru
      _
    // Predicated region
    $region46: #{tpu_custom_call.1} parent=1 // pred_check
      _
    $region47: #{tpu_custom_call.1} parent=1 // pred_check_branch
      %460 = sbr.rel (0) target = $region49
    $region48: #{tpu_custom_call.1} parent=1 // pred_region
      %461 = dma.done [#allocation5], 256
    $region49: #{tpu_custom_call.1} parent=1 // pred_fallthru
      _
    %462 = vsyncpa [#allocation4], 1
    %463 = vsyncpa [#allocation7], 1
    %464 = vsyncpa [#allocation10], 1
    %465 = vsyncpa [#allocation5], 1

</llo_original>
